<compile_context>
chip_gen: v5e
topology: v5e:2x2
jax: 0.10.0
libtpu: 0.0.40
codegen_flags: <defaults>
</compile_context>

<pallas_src>
import functools

import jax
import jax.numpy as jnp
from jax import lax
from jax.experimental import pallas as pl
from jax.experimental.pallas import tpu as pltpu


# ----------------------------------------------------------------------------
# Pallas kernel
# ----------------------------------------------------------------------------
def _spatial_attention_kernel(x_ref, w_ref, o_ref, *, k, c):
    """One grid step processes `bt` images.

    x_ref: (bt*c, Hp, Wp) zero-padded input slab (VMEM).
    w_ref: (2*k*k + 1,) flattened conv params in SMEM:
           [w_max(k*k, row-major), w_avg(k*k, row-major), bias].
    o_ref: (bt, H, W) spatial-attention map (VMEM).
    """
    kk = k * k
    _, hp, wp = x_ref.shape
    bt, h, w = o_ref.shape

    # Leading-dim-only reshape: layout-free (last two dims untouched).
    x = x_ref[...].reshape(bt, c, hp, wp).astype(jnp.float32)

    # Channel descriptors (CBAM): max / mean over the channel axis.
    ch_max = jnp.max(x, axis=1)                    # (bt, Hp, Wp)
    ch_avg = jnp.sum(x, axis=1) * (1.0 / c)        # (bt, Hp, Wp)

    # k x k conv over the two descriptor channels: unrolled scalar-weight FMAs
    # on in-VMEM taps (no im2col, no (kk, ...) intermediate to spill).
    acc = jnp.full((bt, h, w), w_ref[2 * kk], jnp.float32)      # bias
    for dy in range(k):
        for dx in range(k):
            i = dy * k + dx
            acc = acc + w_ref[i] * ch_max[:, dy:dy + h, dx:dx + w]
            acc = acc + w_ref[kk + i] * ch_avg[:, dy:dy + h, dx:dx + w]

    o_ref[...] = jax.nn.sigmoid(acc).astype(o_ref.dtype)


# ----------------------------------------------------------------------------
# Wrapper (pad once, flatten tiny conv params, call pallas_call)
# ----------------------------------------------------------------------------
def spatial_attention_pallas(x, conv_w, conv_b, *, k=3, images_per_step=None):
    """x: (B, C, H, W); conv_w: (1, 2, k, k); conv_b: (1,). Returns (B, 1, H, W)."""
    B, C, H, W = x.shape
    pad = k // 2
    Hp, Wp = H + 2 * pad, W + 2 * pad
    kk = k * k

    if images_per_step is None:
        # Largest divisor of B whose per-step input slab stays well under VMEM
        # (keeps the double-buffered working set modest even on v7x's 64 MiB).
        per_img_bytes = C * Hp * Wp * x.dtype.itemsize
        budget = 4 * 1024 * 1024
        images_per_step = 1
        for cand in range(B, 0, -1):
            if B % cand == 0 and cand * per_img_bytes <= budget:
                images_per_step = cand
                break
    assert B % images_per_step == 0
    bt = images_per_step
    grid = (B // bt,)

    # Spatial zero-pad once; only HBM-side layout work (no 9x tap blow-up).
    x_pad = jnp.pad(x, ((0, 0), (0, 0), (pad, pad), (pad, pad)))
    x_pad = x_pad.reshape(B * C, Hp, Wp)

    # Flatten the tiny conv into an SMEM scalar table: [w_max | w_avg | bias].
    w_flat = jnp.concatenate([
        conv_w[0, 0].reshape(kk),
        conv_w[0, 1].reshape(kk),
        conv_b.reshape(1),
    ]).astype(jnp.float32)

    kernel = functools.partial(_spatial_attention_kernel, k=k, c=C)
    out = pl.pallas_call(
        kernel,
        out_shape=jax.ShapeDtypeStruct((B, H, W), x.dtype),
        grid_spec=pltpu.PrefetchScalarGridSpec(
            num_scalar_prefetch=0,
            grid=grid,
            in_specs=[
                pl.BlockSpec((bt * C, Hp, Wp), lambda i: (i, 0, 0)),      # x slab
                pl.BlockSpec(memory_space=pltpu.MemorySpace.SMEM),        # weights
            ],
            out_specs=pl.BlockSpec((bt, H, W), lambda i: (i, 0, 0)),
        ),
        compiler_params=pltpu.CompilerParams(
            dimension_semantics=("parallel",)),
        cost_estimate=pl.CostEstimate(
            flops=B * H * W * (2 * C + 4 * kk),
            transcendentals=B * H * W,
            bytes_accessed=(B * C * Hp * Wp + B * H * W) * x.dtype.itemsize),
    )(x_pad, w_flat)

    return out[:, None, :, :]                      # (B, 1, H, W) like PyTorch


# ----------------------------------------------------------------------------
# Pure-JAX reference mirroring the PyTorch forward
# ----------------------------------------------------------------------------
def spatial_attention_reference(x, conv_w, conv_b, k=3):
    mx = jnp.max(x, axis=1, keepdims=True)
    mn = jnp.mean(x, axis=1, keepdims=True)
    cat = jnp.concatenate([mx, mn], axis=1)        # (B, 2, H, W)
    pad = k // 2
    y = lax.conv_general_dilated(cat, conv_w, (1, 1),
                                 ((pad, pad), (pad, pad)),
                                 dimension_numbers=("NCHW", "OIHW", "NCHW"))
    y = y + conv_b[None, :, None, None]
    return jax.nn.sigmoid(y)


if __name__ == "__main__":
    key = jax.random.PRNGKey(0)
    kx, kw, kb = jax.random.split(key, 3)
    B, C, H, W, K = 2, 4, 16, 16, 3

    x = jax.random.normal(kx, (B, C, H, W), jnp.float32)
    conv_w = 0.3 * jax.random.normal(kw, (1, 2, K, K), jnp.float32)
    conv_b = 0.1 * jax.random.normal(kb, (1,), jnp.float32)

    fn = jax.jit(functools.partial(spatial_attention_pallas, k=K))
    out = jax.block_until_ready(fn(x, conv_w, conv_b))
    assert out.shape == (B, 1, H, W), out.shape

    ref = spatial_attention_reference(x, conv_w, conv_b, k=K)
    err = float(jnp.max(jnp.abs(out - ref)))
    assert err < 1e-4, f"max abs err {err}"
    print("KERNEL_OK")
</pallas_src>

<mosaic_0001>
module attributes {stable_mosaic.version = 11 : i64} {
  func.func @_spatial_attention_kernel(%arg0: i32, %arg1: memref<8x18x18xf32, #tpu.memory_space<vmem>>, %arg2: memref<19xf32, #tpu.memory_space<smem>>, %arg3: memref<2x16x16xf32, #tpu.memory_space<vmem>>) attributes {dimension_semantics = [#tpu.dimension_semantics<parallel>], iteration_bounds = array<i64: 1>, scalar_prefetch = 0 : i64, scratch_operands = 0 : i64, tpu.core_type = #tpu.core_type<tc>, window_params = [{transform_indices = @transform_0, window_bounds = array<i64: 8, 18, 18>}, {transform_indices = @transform_1, window_bounds = array<i64: 19>}, {transform_indices = @transform_2, window_bounds = array<i64: 2, 16, 16>}]} {
    %c0 = arith.constant 0 : index
    %c0_0 = arith.constant 0 : index
    %c0_1 = arith.constant 0 : index
    %0 = vector.load %arg1[%c0, %c0_0, %c0_1] : memref<8x18x18xf32, #tpu.memory_space<vmem>>, vector<8x18x18xf32>
    %1 = vector.shape_cast %0 : vector<8x18x18xf32> to vector<2x4x18x18xf32>
    %cst = arith.constant dense<0xFF800000> : vector<2x18x18xf32>
    %2 = vector.multi_reduction <maximumf>, %1, %cst [1] : vector<2x4x18x18xf32> to vector<2x18x18xf32>
    %cst_2 = arith.constant dense<0.000000e+00> : vector<2x18x18xf32>
    %3 = vector.multi_reduction <add>, %1, %cst_2 [1] : vector<2x4x18x18xf32> to vector<2x18x18xf32>
    %cst_3 = arith.constant 2.500000e-01 : f32
    %4 = vector.broadcast %cst_3 : f32 to vector<2x18x18xf32>
    %5 = arith.mulf %3, %4 : vector<2x18x18xf32>
    %c18 = arith.constant 18 : index
    %6 = memref.load %arg2[%c18] : memref<19xf32, #tpu.memory_space<smem>>
    %7 = vector.broadcast %6 : f32 to vector<2x16x16xf32>
    %c0_4 = arith.constant 0 : index
    %8 = memref.load %arg2[%c0_4] : memref<19xf32, #tpu.memory_space<smem>>
    %9 = vector.extract_strided_slice %2 {offsets = [0, 0, 0], sizes = [2, 16, 16], strides = [1, 1, 1]} : vector<2x18x18xf32> to vector<2x16x16xf32>
    %10 = vector.broadcast %8 : f32 to vector<2x16x16xf32>
    %11 = arith.mulf %10, %9 : vector<2x16x16xf32>
    %12 = arith.addf %7, %11 : vector<2x16x16xf32>
    %c9 = arith.constant 9 : index
    %13 = memref.load %arg2[%c9] : memref<19xf32, #tpu.memory_space<smem>>
    %14 = vector.extract_strided_slice %5 {offsets = [0, 0, 0], sizes = [2, 16, 16], strides = [1, 1, 1]} : vector<2x18x18xf32> to vector<2x16x16xf32>
    %15 = vector.broadcast %13 : f32 to vector<2x16x16xf32>
    %16 = arith.mulf %15, %14 : vector<2x16x16xf32>
    %17 = arith.addf %12, %16 : vector<2x16x16xf32>
    %c1 = arith.constant 1 : index
    %18 = memref.load %arg2[%c1] : memref<19xf32, #tpu.memory_space<smem>>
    %19 = vector.extract_strided_slice %2 {offsets = [0, 0, 1], sizes = [2, 16, 16], strides = [1, 1, 1]} : vector<2x18x18xf32> to vector<2x16x16xf32>
    %20 = vector.broadcast %18 : f32 to vector<2x16x16xf32>
    %21 = arith.mulf %20, %19 : vector<2x16x16xf32>
    %22 = arith.addf %17, %21 : vector<2x16x16xf32>
    %c10 = arith.constant 10 : index
    %23 = memref.load %arg2[%c10] : memref<19xf32, #tpu.memory_space<smem>>
    %24 = vector.extract_strided_slice %5 {offsets = [0, 0, 1], sizes = [2, 16, 16], strides = [1, 1, 1]} : vector<2x18x18xf32> to vector<2x16x16xf32>
    %25 = vector.broadcast %23 : f32 to vector<2x16x16xf32>
    %26 = arith.mulf %25, %24 : vector<2x16x16xf32>
    %27 = arith.addf %22, %26 : vector<2x16x16xf32>
    %c2 = arith.constant 2 : index
    %28 = memref.load %arg2[%c2] : memref<19xf32, #tpu.memory_space<smem>>
    %29 = vector.extract_strided_slice %2 {offsets = [0, 0, 2], sizes = [2, 16, 16], strides = [1, 1, 1]} : vector<2x18x18xf32> to vector<2x16x16xf32>
    %30 = vector.broadcast %28 : f32 to vector<2x16x16xf32>
    %31 = arith.mulf %30, %29 : vector<2x16x16xf32>
    %32 = arith.addf %27, %31 : vector<2x16x16xf32>
    %c11 = arith.constant 11 : index
    %33 = memref.load %arg2[%c11] : memref<19xf32, #tpu.memory_space<smem>>
    %34 = vector.extract_strided_slice %5 {offsets = [0, 0, 2], sizes = [2, 16, 16], strides = [1, 1, 1]} : vector<2x18x18xf32> to vector<2x16x16xf32>
    %35 = vector.broadcast %33 : f32 to vector<2x16x16xf32>
    %36 = arith.mulf %35, %34 : vector<2x16x16xf32>
    %37 = arith.addf %32, %36 : vector<2x16x16xf32>
    %c3 = arith.constant 3 : index
    %38 = memref.load %arg2[%c3] : memref<19xf32, #tpu.memory_space<smem>>
    %39 = vector.extract_strided_slice %2 {offsets = [0, 1, 0], sizes = [2, 16, 16], strides = [1, 1, 1]} : vector<2x18x18xf32> to vector<2x16x16xf32>
    %40 = vector.broadcast %38 : f32 to vector<2x16x16xf32>
    %41 = arith.mulf %40, %39 : vector<2x16x16xf32>
    %42 = arith.addf %37, %41 : vector<2x16x16xf32>
    %c12 = arith.constant 12 : index
    %43 = memref.load %arg2[%c12] : memref<19xf32, #tpu.memory_space<smem>>
    %44 = vector.extract_strided_slice %5 {offsets = [0, 1, 0], sizes = [2, 16, 16], strides = [1, 1, 1]} : vector<2x18x18xf32> to vector<2x16x16xf32>
    %45 = vector.broadcast %43 : f32 to vector<2x16x16xf32>
    %46 = arith.mulf %45, %44 : vector<2x16x16xf32>
    %47 = arith.addf %42, %46 : vector<2x16x16xf32>
    %c4 = arith.constant 4 : index
    %48 = memref.load %arg2[%c4] : memref<19xf32, #tpu.memory_space<smem>>
    %49 = vector.extract_strided_slice %2 {offsets = [0, 1, 1], sizes = [2, 16, 16], strides = [1, 1, 1]} : vector<2x18x18xf32> to vector<2x16x16xf32>
    %50 = vector.broadcast %48 : f32 to vector<2x16x16xf32>
    %51 = arith.mulf %50, %49 : vector<2x16x16xf32>
    %52 = arith.addf %47, %51 : vector<2x16x16xf32>
    %c13 = arith.constant 13 : index
    %53 = memref.load %arg2[%c13] : memref<19xf32, #tpu.memory_space<smem>>
    %54 = vector.extract_strided_slice %5 {offsets = [0, 1, 1], sizes = [2, 16, 16], strides = [1, 1, 1]} : vector<2x18x18xf32> to vector<2x16x16xf32>
    %55 = vector.broadcast %53 : f32 to vector<2x16x16xf32>
    %56 = arith.mulf %55, %54 : vector<2x16x16xf32>
    %57 = arith.addf %52, %56 : vector<2x16x16xf32>
    %c5 = arith.constant 5 : index
    %58 = memref.load %arg2[%c5] : memref<19xf32, #tpu.memory_space<smem>>
    %59 = vector.extract_strided_slice %2 {offsets = [0, 1, 2], sizes = [2, 16, 16], strides = [1, 1, 1]} : vector<2x18x18xf32> to vector<2x16x16xf32>
    %60 = vector.broadcast %58 : f32 to vector<2x16x16xf32>
    %61 = arith.mulf %60, %59 : vector<2x16x16xf32>
    %62 = arith.addf %57, %61 : vector<2x16x16xf32>
    %c14 = arith.constant 14 : index
    %63 = memref.load %arg2[%c14] : memref<19xf32, #tpu.memory_space<smem>>
    %64 = vector.extract_strided_slice %5 {offsets = [0, 1, 2], sizes = [2, 16, 16], strides = [1, 1, 1]} : vector<2x18x18xf32> to vector<2x16x16xf32>
    %65 = vector.broadcast %63 : f32 to vector<2x16x16xf32>
    %66 = arith.mulf %65, %64 : vector<2x16x16xf32>
    %67 = arith.addf %62, %66 : vector<2x16x16xf32>
    %c6 = arith.constant 6 : index
    %68 = memref.load %arg2[%c6] : memref<19xf32, #tpu.memory_space<smem>>
    %69 = vector.extract_strided_slice %2 {offsets = [0, 2, 0], sizes = [2, 16, 16], strides = [1, 1, 1]} : vector<2x18x18xf32> to vector<2x16x16xf32>
    %70 = vector.broadcast %68 : f32 to vector<2x16x16xf32>
    %71 = arith.mulf %70, %69 : vector<2x16x16xf32>
    %72 = arith.addf %67, %71 : vector<2x16x16xf32>
    %c15 = arith.constant 15 : index
    %73 = memref.load %arg2[%c15] : memref<19xf32, #tpu.memory_space<smem>>
    %74 = vector.extract_strided_slice %5 {offsets = [0, 2, 0], sizes = [2, 16, 16], strides = [1, 1, 1]} : vector<2x18x18xf32> to vector<2x16x16xf32>
    %75 = vector.broadcast %73 : f32 to vector<2x16x16xf32>
    %76 = arith.mulf %75, %74 : vector<2x16x16xf32>
    %77 = arith.addf %72, %76 : vector<2x16x16xf32>
    %c7 = arith.constant 7 : index
    %78 = memref.load %arg2[%c7] : memref<19xf32, #tpu.memory_space<smem>>
    %79 = vector.extract_strided_slice %2 {offsets = [0, 2, 1], sizes = [2, 16, 16], strides = [1, 1, 1]} : vector<2x18x18xf32> to vector<2x16x16xf32>
    %80 = vector.broadcast %78 : f32 to vector<2x16x16xf32>
    %81 = arith.mulf %80, %79 : vector<2x16x16xf32>
    %82 = arith.addf %77, %81 : vector<2x16x16xf32>
    %c16 = arith.constant 16 : index
    %83 = memref.load %arg2[%c16] : memref<19xf32, #tpu.memory_space<smem>>
    %84 = vector.extract_strided_slice %5 {offsets = [0, 2, 1], sizes = [2, 16, 16], strides = [1, 1, 1]} : vector<2x18x18xf32> to vector<2x16x16xf32>
    %85 = vector.broadcast %83 : f32 to vector<2x16x16xf32>
    %86 = arith.mulf %85, %84 : vector<2x16x16xf32>
    %87 = arith.addf %82, %86 : vector<2x16x16xf32>
    %c8 = arith.constant 8 : index
    %88 = memref.load %arg2[%c8] : memref<19xf32, #tpu.memory_space<smem>>
    %89 = vector.extract_strided_slice %2 {offsets = [0, 2, 2], sizes = [2, 16, 16], strides = [1, 1, 1]} : vector<2x18x18xf32> to vector<2x16x16xf32>
    %90 = vector.broadcast %88 : f32 to vector<2x16x16xf32>
    %91 = arith.mulf %90, %89 : vector<2x16x16xf32>
    %92 = arith.addf %87, %91 : vector<2x16x16xf32>
    %c17 = arith.constant 17 : index
    %93 = memref.load %arg2[%c17] : memref<19xf32, #tpu.memory_space<smem>>
    %94 = vector.extract_strided_slice %5 {offsets = [0, 2, 2], sizes = [2, 16, 16], strides = [1, 1, 1]} : vector<2x18x18xf32> to vector<2x16x16xf32>
    %95 = vector.broadcast %93 : f32 to vector<2x16x16xf32>
    %96 = arith.mulf %95, %94 : vector<2x16x16xf32>
    %97 = arith.addf %92, %96 : vector<2x16x16xf32>
    %98 = arith.negf %97 : vector<2x16x16xf32>
    %99 = math.exp %98 : vector<2x16x16xf32>
    %cst_5 = arith.constant 1.000000e+00 : f32
    %100 = vector.broadcast %cst_5 : f32 to vector<2x16x16xf32>
    %101 = arith.addf %100, %99 : vector<2x16x16xf32>
    %102 = arith.divf %100, %101 : vector<2x16x16xf32>
    %c0_6 = arith.constant 0 : index
    %c0_7 = arith.constant 0 : index
    %c0_8 = arith.constant 0 : index
    %103 = vector.load %arg3[%c0_6, %c0_7, %c0_8] : memref<2x16x16xf32, #tpu.memory_space<vmem>>, vector<2x16x16xf32>
    tpu.vector_store %arg3[%c0_6, %c0_7, %c0_8], %102 {strides = array<i32>} : memref<2x16x16xf32, #tpu.memory_space<vmem>>, vector<2x16x16xf32>,
    return
  }
  func.func @transform_0(%arg0: i32) -> (i32, i32, i32) {
    %c0_i32 = arith.constant 0 : i32
    %c0_i32_0 = arith.constant 0 : i32
    %c0_i32_1 = arith.constant 0 : i32
    return %arg0, %c0_i32, %c0_i32_0 : i32, i32, i32
  }
  func.func @transform_1(%arg0: i32) -> i32 {
    %c0_i32 = arith.constant 0 : i32
    %c0_i32_0 = arith.constant 0 : i32
    return %c0_i32 : i32
  }
  func.func @transform_2(%arg0: i32) -> (i32, i32, i32) {
    %c0_i32 = arith.constant 0 : i32
    %c0_i32_0 = arith.constant 0 : i32
    %c0_i32_1 = arith.constant 0 : i32
    return %arg0, %c0_i32, %c0_i32_0 : i32, i32, i32
  }
}

</mosaic_0001>

<llo_original>
// kernel: squeeze.2
$region0: #{squeeze.2}
  %s0 = inlined_call_operand.vmem [shape: f32[3,3], index: 0, kind: input, shape index: {}]
  %s1 = inlined_call_operand.vmem [shape: f32[9], index: 1, kind: output, shape index: {}]
  $region1: #{squeeze.2} parent=0
    #allocation0 [shape = 'u8[4096]{0}', space=vmem, size = 0x1000, scoped, tag = 'scoped mem for output reshape']
    #allocation1 [shape = 'u8[4096]{0}', space=vmem, size = 0x1000, scoped, tag = 'scoped mem for input reshape']
    %s3 = ssub.s32 16, 1
    %v4 = vld [vmem:[%s0] sm:%s3]
    %5 = vst [vmem:[#allocation1] sm:%s3] %v4
    %v6 = vld [vmem:[#allocation1] sm:$0x1]
    %vm7 = vcmask 23552
    %8 = vst.msk [vmem:[#allocation0] sm:$0x1] %vm7, %v6
    %s9 = scalar_lea.vmem [#allocation1], 2
    %v10 = vld [vmem:[%s9] sm:$0x1]
    %11 = vrot.lane.b32.xlu0 %v10, 6
    %v12 = vpop.permute.xlu0 %11
    %vm13 = vcmask 72752
    %14 = vst.msk [vmem:[#allocation0] sm:$0x1] %vm13, %v12
    %s15 = scalar_lea.vmem [#allocation1], 1
    %v16 = vld [vmem:[%s15] sm:$0x1]
    %17 = vrot.lane.b32.xlu0 %v16, 3
    %v18 = vpop.permute.xlu0 %17
    %vm19 = vcmask 48152
    %20 = vst.msk [vmem:[#allocation0] sm:$0x1] %vm19, %v18
    %s22 = ssub.s32 2, 1
    %v23 = vld [vmem:[#allocation0] sm:%s22]
    %s25 = ssub.s32 2, 1
    %26 = vst [vmem:[%s1] sm:%s25] %v23

// kernel: spatial_attention_pallas.1
$region0: #{spatial_attention_pallas.1}
  #allocation0 [shape = 'u32[]', space=smem, size = 0x4, offset = 0x4, fixed_abs, tag = 'smem constant byte address 0x4 - core index']
  #allocation1 [shape = 'u32[72,128]{1,0:T(1,128)}', space=vmem, size = 0x9000, scoped, tag = 'internal scratch']
  %s0 = inlined_call_operand.vmem [shape: f32[8,18,18], index: 0, kind: input, shape index: {}]
  %s1 = inlined_call_operand.vmem [shape: f32[19], index: 1, kind: input, shape index: {}]
  %s2 = inlined_call_operand.hbm [shape: f32[2,16,16], index: 2, kind: output, shape index: {}]
  %s3 = sld [smem:[#allocation0]]
  $region22: #{spatial_attention_pallas.1} parent=0
    _
  %s5 = ssub.s32 1, %s3
  %s6 = scalar_select 0, %s5, %s3
  $region1: #{spatial_attention_pallas.1} parent=0
    #allocation2 [shape = 'u8[512]{0}', space=smem, size = 0x200, scoped, tag = 'input window, operand 1, single buffered']
    #allocation3 [shape = 's32[1]{0}', space=sflag, size = 0x4, scoped, tag = 'scoped memory for spatial_attention_pallas.1']
    #allocation4 [shape = 's32[1]{0}', space=sflag, size = 0x4, scoped, tag = 'scoped memory for spatial_attention_pallas.1']
    #allocation5 [shape = 'u8[16384]{0}', space=vmem, size = 0x4000, scoped, tag = 'output window, operand 0, single buffered']
    %7 = vsyncpa [#allocation4], 0
    %8 = vsyncpa [#allocation3], 0
    // Predicated region
    $region2: #{spatial_attention_pallas.1} parent=1 // pred_check
      _
    $region3: #{spatial_attention_pallas.1} parent=1 // pred_check_branch
      %10 = sbr.rel (0) target = $region5
    $region4: #{spatial_attention_pallas.1} parent=1 // pred_region
      _
    $region5: #{spatial_attention_pallas.1} parent=1 // pred_fallthru
      _
    // Predicated region
    $region6: #{spatial_attention_pallas.1} parent=1 // pred_check
      _
    $region7: #{spatial_attention_pallas.1} parent=1 // pred_check_branch
      %12 = sbr.rel (0) target = $region9
    $region8: #{spatial_attention_pallas.1} parent=1 // pred_region
      %14 = vsyncadd [#allocation4], 0
      %s16 = sshll.u32 %s1, 4
      %s17 = int_to_ptr.vmem [resolvable:$true] %s16
      %19 = dma.vmem_to_smem %s17, 16, [#allocation2], [#allocation4]
    $region9: #{spatial_attention_pallas.1} parent=1 // pred_fallthru
      _
    // Predicated region
    $region10: #{spatial_attention_pallas.1} parent=1 // pred_check
      _
    $region11: #{spatial_attention_pallas.1} parent=1 // pred_check_branch
      %21 = sbr.rel (0) target = $region13
    $region12: #{spatial_attention_pallas.1} parent=1 // pred_region
      %23 = dma.done [#allocation4], 16
    $region13: #{spatial_attention_pallas.1} parent=1 // pred_fallthru
      _
    %24 = sfence
    %v25 = vld [vmem:[%s0] sm:$0xff]
    %v26 = vld [vmem:[%s0 + $0x8] sm:$0xff]
    %v27 = vld [vmem:[%s0 + $0x10] sm:$0x3]
    %v28 = vld [vmem:[%s0 + $0x18] sm:$0xff]
    %v29 = vld [vmem:[%s0 + $0x20] sm:$0xff]
    %v30 = vld [vmem:[%s0 + $0x28] sm:$0x3]
    %v31 = vld [vmem:[%s0 + $0x30] sm:$0xff]
    %v32 = vld [vmem:[%s0 + $0x38] sm:$0xff]
    %v33 = vld [vmem:[%s0 + $0x40] sm:$0x3]
    %v34 = vld [vmem:[%s0 + $0x48] sm:$0xff]
    %v35 = vld [vmem:[%s0 + $0x50] sm:$0xff]
    %v36 = vld [vmem:[%s0 + $0x58] sm:$0x3]
    %v37 = vld [vmem:[%s0 + $0x60] sm:$0xff]
    %v38 = vld [vmem:[%s0 + $0x68] sm:$0xff]
    %v39 = vld [vmem:[%s0 + $0x70] sm:$0x3]
    %v40 = vld [vmem:[%s0 + $0x78] sm:$0xff]
    %v41 = vld [vmem:[%s0 + $0x80] sm:$0xff]
    %v42 = vld [vmem:[%s0 + $0x88] sm:$0x3]
    %v43 = vld [vmem:[%s0 + $0x90] sm:$0xff]
    %v44 = vld [vmem:[%s0 + $0x98] sm:$0xff]
    %v45 = vld [vmem:[%s0 + $0xa0] sm:$0x3]
    %v46 = vld [vmem:[%s0 + $0xa8] sm:$0xff]
    %v47 = vld [vmem:[%s0 + $0xb0] sm:$0xff]
    %v48 = vld [vmem:[%s0 + $0xb8] sm:$0x3]
    %vm49 = vcmask 146432
    %v50 = vsel %vm49, %v25, -inf
    %v51 = vsel %vm49, %v28, -inf
    %v52 = vmax.f32 %v50, %v51
    %v53 = vsel %vm49, %v31, -inf
    %v54 = vmax.f32 %v52, %v53
    %v55 = vsel %vm49, %v34, -inf
    %v56 = vmax.f32 %v54, %v55
    %v57 = vsel %vm49, %v26, -inf
    %v58 = vsel %vm49, %v29, -inf
    %v59 = vmax.f32 %v57, %v58
    %v60 = vsel %vm49, %v32, -inf
    %v61 = vmax.f32 %v59, %v60
    %v62 = vsel %vm49, %v35, -inf
    %v63 = vmax.f32 %v61, %v62
    %vm64 = vcmask 140288
    %v65 = vsel %vm64, %v27, -inf
    %v66 = vsel %vm64, %v30, -inf
    %v67 = vmax.f32 %v65, %v66
    %v68 = vsel %vm64, %v33, -inf
    %v69 = vmax.f32 %v67, %v68
    %v70 = vsel %vm64, %v36, -inf
    %v71 = vmax.f32 %v69, %v70
    %v72 = vsel %vm49, %v37, -inf
    %v73 = vsel %vm49, %v40, -inf
    %v74 = vmax.f32 %v72, %v73
    %v75 = vsel %vm49, %v43, -inf
    %v76 = vmax.f32 %v74, %v75
    %v77 = vsel %vm49, %v46, -inf
    %v78 = vmax.f32 %v76, %v77
    %v79 = vsel %vm49, %v38, -inf
    %v80 = vsel %vm49, %v41, -inf
    %v81 = vmax.f32 %v79, %v80
    %v82 = vsel %vm49, %v44, -inf
    %v83 = vmax.f32 %v81, %v82
    %v84 = vsel %vm49, %v47, -inf
    %v85 = vmax.f32 %v83, %v84
    %v86 = vsel %vm64, %v39, -inf
    %v87 = vsel %vm64, %v42, -inf
    %v88 = vmax.f32 %v86, %v87
    %v89 = vsel %vm64, %v45, -inf
    %v90 = vmax.f32 %v88, %v89
    %v91 = vsel %vm64, %v48, -inf
    %v92 = vmax.f32 %v90, %v91
    %v93 = vsel %vm49, %v25, 0.0
    %v94 = vsel %vm49, %v28, 0.0
    %v95 = vadd.f32 %v93, %v94
    %v96 = vsel %vm49, %v31, 0.0
    %v97 = vadd.f32 %v95, %v96
    %v98 = vsel %vm49, %v34, 0.0
    %v99 = vadd.f32 %v97, %v98
    %v100 = vsel %vm49, %v26, 0.0
    %v101 = vsel %vm49, %v29, 0.0
    %v102 = vadd.f32 %v100, %v101
    %v103 = vsel %vm49, %v32, 0.0
    %v104 = vadd.f32 %v102, %v103
    %v105 = vsel %vm49, %v35, 0.0
    %v106 = vadd.f32 %v104, %v105
    %v107 = vsel %vm64, %v27, 0.0
    %v108 = vsel %vm64, %v30, 0.0
    %v109 = vadd.f32 %v107, %v108
    %v110 = vsel %vm64, %v33, 0.0
    %v111 = vadd.f32 %v109, %v110
    %v112 = vsel %vm64, %v36, 0.0
    %v113 = vadd.f32 %v111, %v112
    %v114 = vsel %vm49, %v37, 0.0
    %v115 = vsel %vm49, %v40, 0.0
    %v116 = vadd.f32 %v114, %v115
    %v117 = vsel %vm49, %v43, 0.0
    %v118 = vadd.f32 %v116, %v117
    %v119 = vsel %vm49, %v46, 0.0
    %v120 = vadd.f32 %v118, %v119
    %v121 = vsel %vm49, %v38, 0.0
    %v122 = vsel %vm49, %v41, 0.0
    %v123 = vadd.f32 %v121, %v122
    %v124 = vsel %vm49, %v44, 0.0
    %v125 = vadd.f32 %v123, %v124
    %v126 = vsel %vm49, %v47, 0.0
    %v127 = vadd.f32 %v125, %v126
    %v128 = vsel %vm64, %v39, 0.0
    %v129 = vsel %vm64, %v42, 0.0
    %v130 = vadd.f32 %v128, %v129
    %v131 = vsel %vm64, %v45, 0.0
    %v132 = vadd.f32 %v130, %v131
    %v133 = vsel %vm64, %v48, 0.0
    %v134 = vadd.f32 %v132, %v133
    %v135 = vmul.f32 %v99, 0.25
    %v136 = vmul.f32 %v106, 0.25
    %v137 = vmul.f32 %v113, 0.25
    %v138 = vmul.f32 %v120, 0.25
    %v139 = vmul.f32 %v127, 0.25
    %v140 = vmul.f32 %v134, 0.25
    %s141 = sld [smem:[#allocation2 + $0x12]]
    %v142 = vstv %s141
    %s143 = sld [smem:[#allocation2]]
    %v144 = vstv %s143
    %v145 = vmul.f32 %v144, %v56
    %v146 = vmul.f32 %v144, %v63
    %v147 = vmul.f32 %v144, %v78
    %v148 = vmul.f32 %v144, %v85
    %v149 = vadd.f32 %v142, %v145
    %v150 = vadd.f32 %v142, %v146
    %v151 = vadd.f32 %v142, %v147
    %v152 = vadd.f32 %v142, %v148
    %s153 = sld [smem:[#allocation2 + $0x9]]
    %v154 = vstv %s153
    %v155 = vmul.f32 %v154, %v135
    %v156 = vmul.f32 %v154, %v136
    %v157 = vmul.f32 %v154, %v138
    %v158 = vmul.f32 %v154, %v139
    %v159 = vadd.f32 %v149, %v155
    %v160 = vadd.f32 %v150, %v156
    %v161 = vadd.f32 %v151, %v157
    %v162 = vadd.f32 %v152, %v158
    %s163 = sld [smem:[#allocation2 + $0x1]]
    %v164 = vstv %s163
    %v165 = vmul.f32 %v164, %v56
    %v166 = vmul.f32 %v164, %v63
    %v167 = vmul.f32 %v164, %v78
    %v168 = vmul.f32 %v164, %v85
    %173 = vrot.lane.b32.xlu0 %v165, 127
    %v174 = vpop.permute.xlu0 %173
    %175 = vrot.lane.b32.xlu0 %v166, 127
    %v176 = vpop.permute.xlu0 %175
    %177 = vrot.lane.b32.xlu0 %v167, 127
    %v178 = vpop.permute.xlu0 %177
    %179 = vrot.lane.b32.xlu0 %v168, 127
    %v180 = vpop.permute.xlu0 %179
    %v185 = vadd.f32 %v159, %v174
    %v186 = vadd.f32 %v160, %v176
    %v187 = vadd.f32 %v161, %v178
    %v188 = vadd.f32 %v162, %v180
    %s189 = sld [smem:[#allocation2 + $0xa]]
    %v190 = vstv %s189
    %v191 = vmul.f32 %v190, %v135
    %v192 = vmul.f32 %v190, %v136
    %v193 = vmul.f32 %v190, %v138
    %v194 = vmul.f32 %v190, %v139
    %199 = vrot.lane.b32.xlu0 %v191, 127
    %v200 = vpop.permute.xlu0 %199
    %201 = vrot.lane.b32.xlu0 %v192, 127
    %v202 = vpop.permute.xlu0 %201
    %203 = vrot.lane.b32.xlu0 %v193, 127
    %v204 = vpop.permute.xlu0 %203
    %205 = vrot.lane.b32.xlu0 %v194, 127
    %v206 = vpop.permute.xlu0 %205
    %v211 = vadd.f32 %v185, %v200
    %v212 = vadd.f32 %v186, %v202
    %v213 = vadd.f32 %v187, %v204
    %v214 = vadd.f32 %v188, %v206
    %s215 = sld [smem:[#allocation2 + $0x2]]
    %v216 = vstv %s215
    %v217 = vmul.f32 %v216, %v56
    %v218 = vmul.f32 %v216, %v63
    %v219 = vmul.f32 %v216, %v78
    %v220 = vmul.f32 %v216, %v85
    %225 = vrot.lane.b32.xlu0 %v217, 126
    %v226 = vpop.permute.xlu0 %225
    %227 = vrot.lane.b32.xlu0 %v218, 126
    %v228 = vpop.permute.xlu0 %227
    %229 = vrot.lane.b32.xlu0 %v219, 126
    %v230 = vpop.permute.xlu0 %229
    %231 = vrot.lane.b32.xlu0 %v220, 126
    %v232 = vpop.permute.xlu0 %231
    %v237 = vadd.f32 %v211, %v226
    %v238 = vadd.f32 %v212, %v228
    %v239 = vadd.f32 %v213, %v230
    %v240 = vadd.f32 %v214, %v232
    %s241 = sld [smem:[#allocation2 + $0xb]]
    %v242 = vstv %s241
    %v243 = vmul.f32 %v242, %v135
    %v244 = vmul.f32 %v242, %v136
    %v245 = vmul.f32 %v242, %v138
    %v246 = vmul.f32 %v242, %v139
    %251 = vrot.lane.b32.xlu0 %v243, 126
    %v252 = vpop.permute.xlu0 %251
    %253 = vrot.lane.b32.xlu0 %v244, 126
    %v254 = vpop.permute.xlu0 %253
    %255 = vrot.lane.b32.xlu0 %v245, 126
    %v256 = vpop.permute.xlu0 %255
    %257 = vrot.lane.b32.xlu0 %v246, 126
    %v258 = vpop.permute.xlu0 %257
    %v263 = vadd.f32 %v237, %v252
    %v264 = vadd.f32 %v238, %v254
    %v265 = vadd.f32 %v239, %v256
    %v266 = vadd.f32 %v240, %v258
    %s267 = sld [smem:[#allocation2 + $0x3]]
    %v268 = vstv %s267
    %v269 = vmul.f32 %v268, %v56
    %v270 = vmul.f32 %v268, %v63
    %v271 = vmul.f32 %v268, %v71
    %v272 = vmul.f32 %v268, %v78
    %v273 = vmul.f32 %v268, %v85
    %v274 = vmul.f32 %v268, %v92
    %vm281 = vcmask 1046528
    %v282 = vrot.slane %v269, 1
    %v283 = vrot.slane %v270, 1
    %v284 = vsel %vm281, %v282, %v283
    %v285 = vrot.slane %v271, 1
    %v286 = vsel %vm281, %v283, %v285
    %v287 = vrot.slane %v272, 1
    %v288 = vrot.slane %v273, 1
    %v289 = vsel %vm281, %v287, %v288
    %v290 = vrot.slane %v274, 1
    %v291 = vsel %vm281, %v288, %v290
    %v296 = vadd.f32 %v263, %v284
    %v297 = vadd.f32 %v264, %v286
    %v298 = vadd.f32 %v265, %v289
    %v299 = vadd.f32 %v266, %v291
    %s300 = sld [smem:[#allocation2 + $0xc]]
    %v301 = vstv %s300
    %v302 = vmul.f32 %v301, %v135
    %v303 = vmul.f32 %v301, %v136
    %v304 = vmul.f32 %v301, %v137
    %v305 = vmul.f32 %v301, %v138
    %v306 = vmul.f32 %v301, %v139
    %v307 = vmul.f32 %v301, %v140
    %v314 = vrot.slane %v302, 1
    %v315 = vrot.slane %v303, 1
    %v316 = vsel %vm281, %v314, %v315
    %v317 = vrot.slane %v304, 1
    %v318 = vsel %vm281, %v315, %v317
    %v319 = vrot.slane %v305, 1
    %v320 = vrot.slane %v306, 1
    %v321 = vsel %vm281, %v319, %v320
    %v322 = vrot.slane %v307, 1
    %v323 = vsel %vm281, %v320, %v322
    %v328 = vadd.f32 %v296, %v316
    %v329 = vadd.f32 %v297, %v318
    %v330 = vadd.f32 %v298, %v321
    %v331 = vadd.f32 %v299, %v323
    %s332 = sld [smem:[#allocation2 + $0x4]]
    %v333 = vstv %s332
    %v334 = vmul.f32 %v333, %v56
    %v335 = vmul.f32 %v333, %v63
    %v336 = vmul.f32 %v333, %v71
    %v337 = vmul.f32 %v333, %v78
    %v338 = vmul.f32 %v333, %v85
    %v339 = vmul.f32 %v333, %v92
    %v346 = vrot.slane %v334, 1
    %v347 = vrot.slane %v335, 1
    %v348 = vsel %vm281, %v346, %v347
    %v349 = vrot.slane %v336, 1
    %v350 = vsel %vm281, %v347, %v349
    %v351 = vrot.slane %v337, 1
    %v352 = vrot.slane %v338, 1
    %v353 = vsel %vm281, %v351, %v352
    %v354 = vrot.slane %v339, 1
    %v355 = vsel %vm281, %v352, %v354
    %356 = vrot.lane.b32.xlu0 %v348, 127
    %v357 = vpop.permute.xlu0 %356
    %358 = vrot.lane.b32.xlu0 %v350, 127
    %v359 = vpop.permute.xlu0 %358
    %360 = vrot.lane.b32.xlu0 %v353, 127
    %v361 = vpop.permute.xlu0 %360
    %362 = vrot.lane.b32.xlu0 %v355, 127
    %v363 = vpop.permute.xlu0 %362
    %v368 = vadd.f32 %v328, %v357
    %v369 = vadd.f32 %v329, %v359
    %v370 = vadd.f32 %v330, %v361
    %v371 = vadd.f32 %v331, %v363
    %s372 = sld [smem:[#allocation2 + $0xd]]
    %v373 = vstv %s372
    %v374 = vmul.f32 %v373, %v135
    %v375 = vmul.f32 %v373, %v136
    %v376 = vmul.f32 %v373, %v137
    %v377 = vmul.f32 %v373, %v138
    %v378 = vmul.f32 %v373, %v139
    %v379 = vmul.f32 %v373, %v140
    %v386 = vrot.slane %v374, 1
    %v387 = vrot.slane %v375, 1
    %v388 = vsel %vm281, %v386, %v387
    %v389 = vrot.slane %v376, 1
    %v390 = vsel %vm281, %v387, %v389
    %v391 = vrot.slane %v377, 1
    %v392 = vrot.slane %v378, 1
    %v393 = vsel %vm281, %v391, %v392
    %v394 = vrot.slane %v379, 1
    %v395 = vsel %vm281, %v392, %v394
    %396 = vrot.lane.b32.xlu0 %v388, 127
    %v397 = vpop.permute.xlu0 %396
    %398 = vrot.lane.b32.xlu0 %v390, 127
    %v399 = vpop.permute.xlu0 %398
    %400 = vrot.lane.b32.xlu0 %v393, 127
    %v401 = vpop.permute.xlu0 %400
    %402 = vrot.lane.b32.xlu0 %v395, 127
    %v403 = vpop.permute.xlu0 %402
    %v408 = vadd.f32 %v368, %v397
    %v409 = vadd.f32 %v369, %v399
    %v410 = vadd.f32 %v370, %v401
    %v411 = vadd.f32 %v371, %v403
    %s412 = sld [smem:[#allocation2 + $0x5]]
    %v413 = vstv %s412
    %v414 = vmul.f32 %v413, %v56
    %v415 = vmul.f32 %v413, %v63
    %v416 = vmul.f32 %v413, %v71
    %v417 = vmul.f32 %v413, %v78
    %v418 = vmul.f32 %v413, %v85
    %v419 = vmul.f32 %v413, %v92
    %v426 = vrot.slane %v414, 1
    %v427 = vrot.slane %v415, 1
    %v428 = vsel %vm281, %v426, %v427
    %v429 = vrot.slane %v416, 1
    %v430 = vsel %vm281, %v427, %v429
    %v431 = vrot.slane %v417, 1
    %v432 = vrot.slane %v418, 1
    %v433 = vsel %vm281, %v431, %v432
    %v434 = vrot.slane %v419, 1
    %v435 = vsel %vm281, %v432, %v434
    %436 = vrot.lane.b32.xlu0 %v428, 126
    %v437 = vpop.permute.xlu0 %436
    %438 = vrot.lane.b32.xlu0 %v430, 126
    %v439 = vpop.permute.xlu0 %438
    %440 = vrot.lane.b32.xlu0 %v433, 126
    %v441 = vpop.permute.xlu0 %440
    %442 = vrot.lane.b32.xlu0 %v435, 126
    %v443 = vpop.permute.xlu0 %442
    %v448 = vadd.f32 %v408, %v437
    %v449 = vadd.f32 %v409, %v439
    %v450 = vadd.f32 %v410, %v441
    %v451 = vadd.f32 %v411, %v443
    %s452 = sld [smem:[#allocation2 + $0xe]]
    %v453 = vstv %s452
    %v454 = vmul.f32 %v453, %v135
    %v455 = vmul.f32 %v453, %v136
    %v456 = vmul.f32 %v453, %v137
    %v457 = vmul.f32 %v453, %v138
    %v458 = vmul.f32 %v453, %v139
    %v459 = vmul.f32 %v453, %v140
    %v466 = vrot.slane %v454, 1
    %v467 = vrot.slane %v455, 1
    %v468 = vsel %vm281, %v466, %v467
    %v469 = vrot.slane %v456, 1
    %v470 = vsel %vm281, %v467, %v469
    %v471 = vrot.slane %v457, 1
    %v472 = vrot.slane %v458, 1
    %v473 = vsel %vm281, %v471, %v472
    %v474 = vrot.slane %v459, 1
    %v475 = vsel %vm281, %v472, %v474
    %476 = vrot.lane.b32.xlu0 %v468, 126
    %v477 = vpop.permute.xlu0 %476
    %478 = vrot.lane.b32.xlu0 %v470, 126
    %v479 = vpop.permute.xlu0 %478
    %480 = vrot.lane.b32.xlu0 %v473, 126
    %v481 = vpop.permute.xlu0 %480
    %482 = vrot.lane.b32.xlu0 %v475, 126
    %v483 = vpop.permute.xlu0 %482
    %v488 = vadd.f32 %v448, %v477
    %v489 = vadd.f32 %v449, %v479
    %v490 = vadd.f32 %v450, %v481
    %v491 = vadd.f32 %v451, %v483
    %s492 = sld [smem:[#allocation2 + $0x6]]
    %v493 = vstv %s492
    %v494 = vmul.f32 %v493, %v56
    %v495 = vmul.f32 %v493, %v63
    %v496 = vmul.f32 %v493, %v71
    %v497 = vmul.f32 %v493, %v78
    %v498 = vmul.f32 %v493, %v85
    %v499 = vmul.f32 %v493, %v92
    %vm506 = vcmask 1045504
    %v507 = vrot.slane %v494, 2
    %v508 = vrot.slane %v495, 2
    %v509 = vsel %vm506, %v507, %v508
    %v510 = vrot.slane %v496, 2
    %v511 = vsel %vm506, %v508, %v510
    %v512 = vrot.slane %v497, 2
    %v513 = vrot.slane %v498, 2
    %v514 = vsel %vm506, %v512, %v513
    %v515 = vrot.slane %v499, 2
    %v516 = vsel %vm506, %v513, %v515
    %v521 = vadd.f32 %v488, %v509
    %v522 = vadd.f32 %v489, %v511
    %v523 = vadd.f32 %v490, %v514
    %v524 = vadd.f32 %v491, %v516
    %s525 = sld [smem:[#allocation2 + $0xf]]
    %v526 = vstv %s525
    %v527 = vmul.f32 %v526, %v135
    %v528 = vmul.f32 %v526, %v136
    %v529 = vmul.f32 %v526, %v137
    %v530 = vmul.f32 %v526, %v138
    %v531 = vmul.f32 %v526, %v139
    %v532 = vmul.f32 %v526, %v140
    %v539 = vrot.slane %v527, 2
    %v540 = vrot.slane %v528, 2
    %v541 = vsel %vm506, %v539, %v540
    %v542 = vrot.slane %v529, 2
    %v543 = vsel %vm506, %v540, %v542
    %v544 = vrot.slane %v530, 2
    %v545 = vrot.slane %v531, 2
    %v546 = vsel %vm506, %v544, %v545
    %v547 = vrot.slane %v532, 2
    %v548 = vsel %vm506, %v545, %v547
    %v553 = vadd.f32 %v521, %v541
    %v554 = vadd.f32 %v522, %v543
    %v555 = vadd.f32 %v523, %v546
    %v556 = vadd.f32 %v524, %v548
    %s557 = sld [smem:[#allocation2 + $0x7]]
    %v558 = vstv %s557
    %v559 = vmul.f32 %v558, %v56
    %v560 = vmul.f32 %v558, %v63
    %v561 = vmul.f32 %v558, %v71
    %v562 = vmul.f32 %v558, %v78
    %v563 = vmul.f32 %v558, %v85
    %v564 = vmul.f32 %v558, %v92
    %v571 = vrot.slane %v559, 2
    %v572 = vrot.slane %v560, 2
    %v573 = vsel %vm506, %v571, %v572
    %v574 = vrot.slane %v561, 2
    %v575 = vsel %vm506, %v572, %v574
    %v576 = vrot.slane %v562, 2
    %v577 = vrot.slane %v563, 2
    %v578 = vsel %vm506, %v576, %v577
    %v579 = vrot.slane %v564, 2
    %v580 = vsel %vm506, %v577, %v579
    %581 = vrot.lane.b32.xlu0 %v573, 127
    %v582 = vpop.permute.xlu0 %581
    %583 = vrot.lane.b32.xlu0 %v575, 127
    %v584 = vpop.permute.xlu0 %583
    %585 = vrot.lane.b32.xlu0 %v578, 127
    %v586 = vpop.permute.xlu0 %585
    %587 = vrot.lane.b32.xlu0 %v580, 127
    %v588 = vpop.permute.xlu0 %587
    %v593 = vadd.f32 %v553, %v582
    %v594 = vadd.f32 %v554, %v584
    %v595 = vadd.f32 %v555, %v586
    %v596 = vadd.f32 %v556, %v588
    %s597 = sld [smem:[#allocation2 + $0x10]]
    %v598 = vstv %s597
    %v599 = vmul.f32 %v598, %v135
    %v600 = vmul.f32 %v598, %v136
    %v601 = vmul.f32 %v598, %v137
    %v602 = vmul.f32 %v598, %v138
    %v603 = vmul.f32 %v598, %v139
    %v604 = vmul.f32 %v598, %v140
    %v611 = vrot.slane %v599, 2
    %v612 = vrot.slane %v600, 2
    %v613 = vsel %vm506, %v611, %v612
    %v614 = vrot.slane %v601, 2
    %v615 = vsel %vm506, %v612, %v614
    %v616 = vrot.slane %v602, 2
    %v617 = vrot.slane %v603, 2
    %v618 = vsel %vm506, %v616, %v617
    %v619 = vrot.slane %v604, 2
    %v620 = vsel %vm506, %v617, %v619
    %621 = vrot.lane.b32.xlu0 %v613, 127
    %v622 = vpop.permute.xlu0 %621
    %623 = vrot.lane.b32.xlu0 %v615, 127
    %v624 = vpop.permute.xlu0 %623
    %625 = vrot.lane.b32.xlu0 %v618, 127
    %v626 = vpop.permute.xlu0 %625
    %627 = vrot.lane.b32.xlu0 %v620, 127
    %v628 = vpop.permute.xlu0 %627
    %v633 = vadd.f32 %v593, %v622
    %v634 = vadd.f32 %v594, %v624
    %v635 = vadd.f32 %v595, %v626
    %v636 = vadd.f32 %v596, %v628
    %s637 = sld [smem:[#allocation2 + $0x8]]
    %v638 = vstv %s637
    %v639 = vmul.f32 %v638, %v56
    %v640 = vmul.f32 %v638, %v63
    %v641 = vmul.f32 %v638, %v71
    %v642 = vmul.f32 %v638, %v78
    %v643 = vmul.f32 %v638, %v85
    %v644 = vmul.f32 %v638, %v92
    %v651 = vrot.slane %v639, 2
    %v652 = vrot.slane %v640, 2
    %v653 = vsel %vm506, %v651, %v652
    %v654 = vrot.slane %v641, 2
    %v655 = vsel %vm506, %v652, %v654
    %v656 = vrot.slane %v642, 2
    %v657 = vrot.slane %v643, 2
    %v658 = vsel %vm506, %v656, %v657
    %v659 = vrot.slane %v644, 2
    %v660 = vsel %vm506, %v657, %v659
    %661 = vrot.lane.b32.xlu0 %v653, 126
    %v662 = vpop.permute.xlu0 %661
    %663 = vrot.lane.b32.xlu0 %v655, 126
    %v664 = vpop.permute.xlu0 %663
    %665 = vrot.lane.b32.xlu0 %v658, 126
    %v666 = vpop.permute.xlu0 %665
    %667 = vrot.lane.b32.xlu0 %v660, 126
    %v668 = vpop.permute.xlu0 %667
    %v673 = vadd.f32 %v633, %v662
    %v674 = vadd.f32 %v634, %v664
    %v675 = vadd.f32 %v635, %v666
    %v676 = vadd.f32 %v636, %v668
    %s677 = sld [smem:[#allocation2 + $0x11]]
    %v678 = vstv %s677
    %v679 = vmul.f32 %v678, %v135
    %v680 = vmul.f32 %v678, %v136
    %v681 = vmul.f32 %v678, %v137
    %v682 = vmul.f32 %v678, %v138
    %v683 = vmul.f32 %v678, %v139
    %v684 = vmul.f32 %v678, %v140
    %v691 = vrot.slane %v679, 2
    %v692 = vrot.slane %v680, 2
    %v693 = vsel %vm506, %v691, %v692
    %v694 = vrot.slane %v681, 2
    %v695 = vsel %vm506, %v692, %v694
    %v696 = vrot.slane %v682, 2
    %v697 = vrot.slane %v683, 2
    %v698 = vsel %vm506, %v696, %v697
    %v699 = vrot.slane %v684, 2
    %v700 = vsel %vm506, %v697, %v699
    %701 = vrot.lane.b32.xlu0 %v693, 126
    %v702 = vpop.permute.xlu0 %701
    %703 = vrot.lane.b32.xlu0 %v695, 126
    %v704 = vpop.permute.xlu0 %703
    %705 = vrot.lane.b32.xlu0 %v698, 126
    %v706 = vpop.permute.xlu0 %705
    %707 = vrot.lane.b32.xlu0 %v700, 126
    %v708 = vpop.permute.xlu0 %707
    %v713 = vadd.f32 %v673, %v702
    %v714 = vadd.f32 %v674, %v704
    %v715 = vadd.f32 %v675, %v706
    %v716 = vadd.f32 %v676, %v708
    %v717 = vxor.u32 %v713, 2147483648
    %v718 = vxor.u32 %v714, 2147483648
    %v719 = vxor.u32 %v715, 2147483648
    %v720 = vxor.u32 %v716, 2147483648
    %v721 = vmul.f32 %v717, 1.442695
    %v722 = vpow.pop %v721
    %v723 = vmul.f32 %v718, 1.442695
    %v724 = vpow.pop %v723
    %v725 = vmul.f32 %v719, 1.442695
    %v726 = vpow.pop %v725
    %v727 = vmul.f32 %v720, 1.442695
    %v728 = vpow.pop %v727
    %v729 = vadd.f32 %v722, 1.0
    %v730 = vadd.f32 %v724, 1.0
    %v731 = vadd.f32 %v726, 1.0
    %v732 = vadd.f32 %v728, 1.0
    %v733 = vrcp.pop %v729
    %v734 = vmul.f32 %v729, %v733
    %v735 = vsub.f32 1.0, %v734
    %v736 = vmul.f32 %v733, %v735
    %v737 = vadd.f32 %v733, %v736
    %vm738 = vweird.f32 %v729
    %vm739 = vweird.f32 %v733
    %vm740 = vmor %vm738, %vm739
    %v741 = vsel %vm740, %v733, %v737
    %v742 = vand.u32 2147483647, %v729
    %vm743 = vcmp.eq.f32.partialorder %v742, 8.507059e+37
    %v744 = vand.u32 %v729, 2147483648
    %v745 = vor.u32 1.1754944e-38, %v744
    %v746 = vsel %vm743, %v745, %v741
    %v747 = vmul.f32 1.0, %v746
    %v748 = vrcp.pop %v730
    %v749 = vmul.f32 %v730, %v748
    %v750 = vsub.f32 1.0, %v749
    %v751 = vmul.f32 %v748, %v750
    %v752 = vadd.f32 %v748, %v751
    %vm753 = vweird.f32 %v730
    %vm754 = vweird.f32 %v748
    %vm755 = vmor %vm753, %vm754
    %v756 = vsel %vm755, %v748, %v752
    %v757 = vand.u32 2147483647, %v730
    %vm758 = vcmp.eq.f32.partialorder %v757, 8.507059e+37
    %v759 = vand.u32 %v730, 2147483648
    %v760 = vor.u32 1.1754944e-38, %v759
    %v761 = vsel %vm758, %v760, %v756
    %v762 = vmul.f32 1.0, %v761
    %v763 = vrcp.pop %v731
    %v764 = vmul.f32 %v731, %v763
    %v765 = vsub.f32 1.0, %v764
    %v766 = vmul.f32 %v763, %v765
    %v767 = vadd.f32 %v763, %v766
    %vm768 = vweird.f32 %v731
    %vm769 = vweird.f32 %v763
    %vm770 = vmor %vm768, %vm769
    %v771 = vsel %vm770, %v763, %v767
    %v772 = vand.u32 2147483647, %v731
    %vm773 = vcmp.eq.f32.partialorder %v772, 8.507059e+37
    %v774 = vand.u32 %v731, 2147483648
    %v775 = vor.u32 1.1754944e-38, %v774
    %v776 = vsel %vm773, %v775, %v771
    %v777 = vmul.f32 1.0, %v776
    %v778 = vrcp.pop %v732
    %v779 = vmul.f32 %v732, %v778
    %v780 = vsub.f32 1.0, %v779
    %v781 = vmul.f32 %v778, %v780
    %v782 = vadd.f32 %v778, %v781
    %vm783 = vweird.f32 %v732
    %vm784 = vweird.f32 %v778
    %vm785 = vmor %vm783, %vm784
    %v786 = vsel %vm785, %v778, %v782
    %v787 = vand.u32 2147483647, %v732
    %vm788 = vcmp.eq.f32.partialorder %v787, 8.507059e+37
    %v789 = vand.u32 %v732, 2147483648
    %v790 = vor.u32 1.1754944e-38, %v789
    %v791 = vsel %vm788, %v790, %v786
    %v792 = vmul.f32 1.0, %v791
    %vm793 = vcmask 130048
    %794 = vst.msk [vmem:[#allocation5] sm:$0xff] %vm793, %v747
    %795 = vst.msk [vmem:[#allocation5 + $0x8] sm:$0xff] %vm793, %v762
    %796 = vst.msk [vmem:[#allocation5 + $0x10] sm:$0xff] %vm793, %v777
    %797 = vst.msk [vmem:[#allocation5 + $0x18] sm:$0xff] %vm793, %v792
    // Predicated region
    $region14: #{spatial_attention_pallas.1} parent=1 // pred_check
      _
    $region15: #{spatial_attention_pallas.1} parent=1 // pred_check_branch
      %799 = sbr.rel (0) target = $region17
    $region16: #{spatial_attention_pallas.1} parent=1 // pred_region
      %801 = vsyncadd [#allocation3], 0
      %s802 = sshll.u32 [#allocation5], 4
      %s803 = int_to_ptr.vmem [resolvable:$true] %s802
      %s804 = sshll.u32 %s2, 4
      %s805 = int_to_ptr.hbm [resolvable:$true] %s804
      %810 = dma.vmem_to_hbm [thread:$0]  %s803, 512, %s805, [#allocation3], 128, 128, 8
    $region17: #{spatial_attention_pallas.1} parent=1 // pred_fallthru
      _
    // Predicated region
    $region18: #{spatial_attention_pallas.1} parent=1 // pred_check
      _
    $region19: #{spatial_attention_pallas.1} parent=1 // pred_check_branch
      %812 = sbr.rel (0) target = $region21
    $region20: #{spatial_attention_pallas.1} parent=1 // pred_region
      %814 = dma.done [#allocation3], 512
    $region21: #{spatial_attention_pallas.1} parent=1 // pred_fallthru
      _
    %815 = vsyncpa [#allocation3], 1
    %816 = vsyncpa [#allocation4], 1

</llo_original>
